<compile_context>
chip_gen: v7x
topology: tpu7x:2x2x1
jax: 0.10.0
libtpu: 0.0.40
codegen_flags: <defaults>
</compile_context>

<pallas_src>
import jax
import jax.numpy as jnp
from jax.experimental import pallas as pl
from jax.experimental.pallas import tpu as pltpu


def _ffm_v2_kernel(x1_ref, x2_ref, w_ref, b_ref, out_ref):
    """Fused 1x1-conv (as matmul) + BN-affine + ReLU + channel concat.

    x1_ref : (1, Cin,      hw_tile)   tile of input1 (NCHW with HW flattened)
    x2_ref : (1, C2,       hw_tile)   tile of input2
    w_ref  : (Cout, Cin)              BN-folded conv weight (grid-resident)
    b_ref  : (Cout, 1)                BN-folded bias, f32 (grid-resident)
    out_ref: (1, Cout + C2, hw_tile)  tile of concatenated output
    """
    cout = w_ref.shape[0]
    # (Cout, Cin) @ (Cin, hw_tile) -> (Cout, hw_tile); f32 accumulation on MXU.
    y = jnp.dot(w_ref[...], x1_ref[0], preferred_element_type=jnp.float32)
    y = y + b_ref[...]                       # (Cout, 1) broadcast over lanes
    y = jnp.maximum(y, 0.0)                  # ReLU (in f32, before the cast)
    # Channel (sublane) concat: conv result on top, x2 pass-through below.
    out_ref[0, :cout, :] = y.astype(out_ref.dtype)
    out_ref[0, cout:, :] = x2_ref[0].astype(out_ref.dtype)


def _choose_tile_hw(hw, batch, bytes_per_lane,
                    max_tile=4096, vmem_budget=22 * 1024 * 1024,
                    target_steps=8, min_parallel_tile=512):
    """Pick the HW (lane) tile.

    bytes_per_lane: double-buffered HBM<->VMEM bytes per spatial position
    (inputs + output).  Chooses the largest 128-multiple tile that fits the
    VMEM budget, then shrinks (not below `min_parallel_tile`) until the grid
    has enough steps to pipeline and to feed both v7x TensorCores.
    """
    if hw <= 128:
        return hw                                  # full-extent block is legal
    tile = min(max_tile, (hw // 128) * 128)        # 128-multiple, <= HW
    tile = max(tile, 128)
    while tile > 128 and bytes_per_lane * tile > vmem_budget:
        tile -= 128
    while tile > min_parallel_tile and batch * pl.cdiv(hw, tile) < target_steps:
        tile = max(min_parallel_tile, ((tile // 2) // 128) * 128)
    return tile


def ffm_v2_pallas(input1, input2, weight, gamma, beta, running_mean,
                  running_var, eps=1e-5, max_tile_hw=4096):
    """input1: (B, Cin, H, W)  input2: (B, C2, H, W) -> (B, Cout + C2, H, W).

    weight: (Cout, Cin) 1x1 conv weight (bias=False); BN params are (Cout,).
    The kernel computes in input1's dtype (feed bf16 for the fast path) with
    f32 accumulation; output dtype is promote(input1.dtype, input2.dtype).
    """
    B, Cin, H, W = input1.shape
    B2, C2, H2, W2 = input2.shape
    assert (B, H, W) == (B2, H2, W2), "spatial/batch mismatch between inputs"
    Cout = weight.shape[0]
    HW = H * W
    out_dtype = jnp.promote_types(input1.dtype, input2.dtype)

    # Fold BatchNorm (inference) into the conv: y = (W*s) x + (beta - mean*s).
    scale = gamma.astype(jnp.float32) / jnp.sqrt(
        running_var.astype(jnp.float32) + eps)                     # (Cout,)
    w_folded = (weight.astype(jnp.float32) * scale[:, None]).astype(input1.dtype)
    b_folded = (beta.astype(jnp.float32)
                - running_mean.astype(jnp.float32) * scale)[:, None]  # (Cout,1) f32

    # NCHW -> (B, C, H*W): pure views, no data movement.
    x1 = input1.reshape(B, Cin, HW)
    x2 = input2.reshape(B, C2, HW)

    in1_b = jnp.dtype(input1.dtype).itemsize
    in2_b = jnp.dtype(input2.dtype).itemsize
    out_b = jnp.dtype(out_dtype).itemsize
    # Double-buffered bytes per spatial position (x1 + x2 + output tiles).
    bytes_per_lane = 2 * (Cin * in1_b + C2 * in2_b + (Cout + C2) * out_b)

    tile_hw = _choose_tile_hw(HW, B, bytes_per_lane, max_tile=max_tile_hw)
    grid = (B, pl.cdiv(HW, tile_hw))    # partial last HW block is masked

    cost = pl.CostEstimate(
        flops=2 * B * HW * Cin * Cout,
        transcendentals=0,
        bytes_accessed=(x1.size * in1_b + x2.size * in2_b
                        + w_folded.size * in1_b + b_folded.size * 4
                        + B * (Cout + C2) * HW * out_b),
    )

    out_flat = pl.pallas_call(
        _ffm_v2_kernel,
        out_shape=jax.ShapeDtypeStruct((B, Cout + C2, HW), out_dtype),
        grid_spec=pltpu.PrefetchScalarGridSpec(
            num_scalar_prefetch=0,
            grid=grid,
            in_specs=[
                pl.BlockSpec((1, Cin, tile_hw), lambda b, j: (b, 0, j)),
                pl.BlockSpec((1, C2, tile_hw), lambda b, j: (b, 0, j)),
                pl.BlockSpec((Cout, Cin), lambda b, j: (0, 0)),   # resident
                pl.BlockSpec((Cout, 1), lambda b, j: (0, 0)),     # resident
            ],
            out_specs=pl.BlockSpec((1, Cout + C2, tile_hw),
                                   lambda b, j: (b, 0, j)),
        ),
        compiler_params=pltpu.CompilerParams(
            dimension_semantics=("parallel", "parallel"),
            # Above the 16 MiB (v5e) / 32 MiB (v6e/v7x) defaults, well under
            # physical VMEM on every generation (v7x has only 64 MiB).
            vmem_limit_bytes=40 * 1024 * 1024,
        ),
        cost_estimate=cost,
    )(x1, x2, w_folded, b_folded)

    # (B, Cout+C2, HW) -> NCHW, again a free reshape.
    return out_flat.reshape(B, Cout + C2, H, W)


def _reference(input1, input2, weight, gamma, beta, mean, var, eps=1e-5):
    """Pure-JAX f32 reference: Conv1x1(bias=False) + BN(eval) + ReLU + concat."""
    y = jnp.einsum('bchw,oc->bohw', input1, weight)
    scale = gamma / jnp.sqrt(var + eps)
    y = y * scale[None, :, None, None] + (beta - mean * scale)[None, :, None, None]
    y = jnp.maximum(y, 0.0)
    return jnp.concatenate([y, input2], axis=1)


if __name__ == "__main__":
    # Small shapes consistent with the module (scaled-down channel counts,
    # H*W a multiple of 128 so lane-dense HW tiling is exercised).
    B, Cin, Cout, C2, H, W = 2, 32, 16, 16, 16, 16

    key = jax.random.PRNGKey(0)
    k1, k2, k3, k4, k5, k6, k7 = jax.random.split(key, 7)

    input1 = jax.random.normal(k1, (B, Cin, H, W), dtype=jnp.float32)
    input2 = jax.random.normal(k2, (B, C2, H, W), dtype=jnp.float32)

    # Deterministic synthetic parameters (Conv2d 1x1 bias=False + BN + ReLU).
    weight = jax.random.normal(k3, (Cout, Cin), dtype=jnp.float32) * 0.05
    gamma = 1.0 + 0.1 * jax.random.normal(k4, (Cout,), dtype=jnp.float32)
    beta = 0.1 * jax.random.normal(k5, (Cout,), dtype=jnp.float32)
    running_mean = 0.1 * jax.random.normal(k6, (Cout,), dtype=jnp.float32)
    running_var = jnp.abs(1.0 + 0.1 * jax.random.normal(k7, (Cout,), dtype=jnp.float32))

    ref = _reference(input1, input2, weight, gamma, beta,
                     running_mean, running_var)

    # f32 path: bit-for-bit same math as the module, tight tolerance.
    out_f32 = jax.block_until_ready(
        ffm_v2_pallas(input1, input2, weight, gamma, beta,
                      running_mean, running_var))
    assert out_f32.shape == (B, Cout + C2, H, W), out_f32.shape
    assert jnp.allclose(out_f32, ref, atol=1e-4, rtol=1e-4), \
        float(jnp.max(jnp.abs(out_f32 - ref)))

    # bf16 path: the bandwidth-optimized deployment dtype (halved HBM traffic
    # and VMEM footprint); f32 accumulation keeps the error at bf16 rounding.
    out_bf16 = jax.block_until_ready(
        ffm_v2_pallas(input1.astype(jnp.bfloat16), input2.astype(jnp.bfloat16),
                      weight, gamma, beta, running_mean, running_var))
    assert out_bf16.dtype == jnp.bfloat16
    assert jnp.allclose(out_bf16.astype(jnp.float32), ref,
                        atol=5e-2, rtol=5e-2), \
        float(jnp.max(jnp.abs(out_bf16.astype(jnp.float32) - ref)))

    print("KERNEL_OK")
</pallas_src>

<mosaic_0001>
module attributes {stable_mosaic.version = 11 : i64} {
  func.func @_ffm_v2_kernel(%arg0: i32, %arg1: i32, %arg2: memref<1x32x256xf32, #tpu.memory_space<vmem>>, %arg3: memref<1x16x256xf32, #tpu.memory_space<vmem>>, %arg4: memref<16x32xf32, #tpu.memory_space<vmem>>, %arg5: memref<16x1xf32, #tpu.memory_space<vmem>>, %arg6: memref<1x32x256xf32, #tpu.memory_space<vmem>>) attributes {dimension_semantics = [#tpu.dimension_semantics<parallel>, #tpu.dimension_semantics<parallel>], iteration_bounds = array<i64: 2, 1>, scalar_prefetch = 0 : i64, scratch_operands = 0 : i64, tpu.core_type = #tpu.core_type<tc>, window_params = [{transform_indices = @transform_0, window_bounds = array<i64: 1, 32, 256>}, {transform_indices = @transform_1, window_bounds = array<i64: 1, 16, 256>}, {pipeline_mode = #tpu.pipeline_mode<synchronous>, transform_indices = @transform_2, window_bounds = array<i64: 16, 32>}, {pipeline_mode = #tpu.pipeline_mode<synchronous>, transform_indices = @transform_3, window_bounds = array<i64: 16, 1>}, {transform_indices = @transform_4, window_bounds = array<i64: 1, 32, 256>}]} {
    %c0 = arith.constant 0 : index
    %c0_0 = arith.constant 0 : index
    %0 = vector.load %arg4[%c0, %c0_0] : memref<16x32xf32, #tpu.memory_space<vmem>>, vector<16x32xf32>
    %c0_1 = arith.constant 0 : index
    %c0_2 = arith.constant 0 : index
    %c0_3 = arith.constant 0 : index
    %1 = vector.load %arg2[%c0_1, %c0_2, %c0_3] : memref<1x32x256xf32, #tpu.memory_space<vmem>>, vector<1x32x256xf32>
    %2 = vector.shape_cast %1 : vector<1x32x256xf32> to vector<32x256xf32>
    %cst = arith.constant dense<0.000000e+00> : vector<16x256xf32>
    %3 = tpu.matmul %0, %2, %cst {dimension_numbers = #tpu.dot_dimension_numbers<[1], [0], [0], [1], [0, 0, 1, 1], [], []>} : vector<16x32xf32>, vector<32x256xf32>, vector<16x256xf32> -> vector<16x256xf32>
    %c0_4 = arith.constant 0 : index
    %c0_5 = arith.constant 0 : index
    %4 = vector.load %arg5[%c0_4, %c0_5] : memref<16x1xf32, #tpu.memory_space<vmem>>, vector<16x1xf32>
    %5 = vector.broadcast %4 : vector<16x1xf32> to vector<16x256xf32>
    %6 = arith.addf %3, %5 : vector<16x256xf32>
    %cst_6 = arith.constant 0.000000e+00 : f32
    %7 = vector.broadcast %cst_6 : f32 to vector<16x256xf32>
    %8 = arith.maximumf %6, %7 : vector<16x256xf32>
    %c0_7 = arith.constant 0 : index
    %c0_8 = arith.constant 0 : index
    %c0_9 = arith.constant 0 : index
    %9 = vector.load %arg6[%c0_7, %c0_8, %c0_9] : memref<1x32x256xf32, #tpu.memory_space<vmem>>, vector<1x16x256xf32>
    %10 = vector.shape_cast %9 : vector<1x16x256xf32> to vector<16x256xf32>
    %11 = vector.shape_cast %8 : vector<16x256xf32> to vector<1x16x256xf32>
    tpu.vector_store %arg6[%c0_7, %c0_8, %c0_9], %11 {strides = array<i32>} : memref<1x32x256xf32, #tpu.memory_space<vmem>>, vector<1x16x256xf32>,
    %c0_10 = arith.constant 0 : index
    %c0_11 = arith.constant 0 : index
    %c0_12 = arith.constant 0 : index
    %12 = vector.load %arg3[%c0_10, %c0_11, %c0_12] : memref<1x16x256xf32, #tpu.memory_space<vmem>>, vector<1x16x256xf32>
    %13 = vector.shape_cast %12 : vector<1x16x256xf32> to vector<16x256xf32>
    %c0_13 = arith.constant 0 : index
    %c16 = arith.constant 16 : index
    %c0_14 = arith.constant 0 : index
    %14 = vector.load %arg6[%c0_13, %c16, %c0_14] : memref<1x32x256xf32, #tpu.memory_space<vmem>>, vector<1x16x256xf32>
    %15 = vector.shape_cast %14 : vector<1x16x256xf32> to vector<16x256xf32>
    %16 = vector.shape_cast %13 : vector<16x256xf32> to vector<1x16x256xf32>
    tpu.vector_store %arg6[%c0_13, %c16, %c0_14], %16 {strides = array<i32>} : memref<1x32x256xf32, #tpu.memory_space<vmem>>, vector<1x16x256xf32>,
    return
  }
  func.func @transform_0(%arg0: i32, %arg1: i32) -> (i32, i32, i32) {
    %c0_i32 = arith.constant 0 : i32
    %c0_i32_0 = arith.constant 0 : i32
    return %arg0, %c0_i32, %arg1 : i32, i32, i32
  }
  func.func @transform_1(%arg0: i32, %arg1: i32) -> (i32, i32, i32) {
    %c0_i32 = arith.constant 0 : i32
    %c0_i32_0 = arith.constant 0 : i32
    return %arg0, %c0_i32, %arg1 : i32, i32, i32
  }
  func.func @transform_2(%arg0: i32, %arg1: i32) -> (i32, i32) {
    %c0_i32 = arith.constant 0 : i32
    %c0_i32_0 = arith.constant 0 : i32
    %c0_i32_1 = arith.constant 0 : i32
    return %c0_i32, %c0_i32_0 : i32, i32
  }
  func.func @transform_3(%arg0: i32, %arg1: i32) -> (i32, i32) {
    %c0_i32 = arith.constant 0 : i32
    %c0_i32_0 = arith.constant 0 : i32
    %c0_i32_1 = arith.constant 0 : i32
    return %c0_i32, %c0_i32_0 : i32, i32
  }
  func.func @transform_4(%arg0: i32, %arg1: i32) -> (i32, i32, i32) {
    %c0_i32 = arith.constant 0 : i32
    %c0_i32_0 = arith.constant 0 : i32
    return %arg0, %c0_i32, %arg1 : i32, i32, i32
  }
}

</mosaic_0001>

<llo_original>
// kernel: tpu_custom_call.1
$region0: #{tpu_custom_call.1}
  #allocation0 [shape = 'u32[]', space=smem, size = 0x4, offset = 0x4, fixed_abs, tag = 'smem constant byte address 0x4 - core index']
  #allocation1 [shape = 'u32[144,128]{1,0:T(1,128)}', space=vmem, size = 0x12000, scoped, tag = 'internal scratch']
  %s0 = inlined_call_operand.hbm [shape: f32[2,32,256], index: 0, kind: input, shape index: {}]
  %s1 = inlined_call_operand.hbm [shape: f32[2,16,256], index: 1, kind: input, shape index: {}]
  %s2 = inlined_call_operand.vmem [shape: f32[16,32], index: 2, kind: input, shape index: {}]
  %s3 = inlined_call_operand.vmem [shape: f32[16,1], index: 3, kind: input, shape index: {}]
  %s4 = inlined_call_operand.hbm [shape: f32[2,32,256], index: 4, kind: output, shape index: {}]
  %s5 = sld [smem:[#allocation0]]
  $region57: #{tpu_custom_call.1} parent=0
    _
  %s7 = ssub.s32 1, %s5
  %s8 = scalar_select 0, %s7, %s5
  $region1: #{tpu_custom_call.1} parent=0
    #allocation2 [shape = 'u8[65536]{0}', space=vmem, size = 0x10000, scoped, tag = 'input window, operand 0']
    #allocation3 [shape = 's32[2]{0}', space=sflag, size = 0x8, scoped, tag = 'scoped memory for tpu_custom_call.1']
    #allocation4 [shape = 's32[2]{0}', space=sflag, size = 0x8, scoped, tag = 'scoped memory for tpu_custom_call.1']
    #allocation5 [shape = 'u8[32768]{0}', space=vmem, size = 0x8000, scoped, tag = 'input window, operand 1']
    #allocation6 [shape = 's32[2]{0}', space=sflag, size = 0x8, scoped, tag = 'scoped memory for tpu_custom_call.1']
    #allocation7 [shape = 'u8[65536]{0}', space=vmem, size = 0x10000, scoped, tag = 'output window, operand 0']
    %9 = vsyncpa [#allocation3], 0
    %s10 = scalar_lea.sflag [#allocation3], 1
    %11 = vsyncpa %s10, 0
    %12 = vsyncpa [#allocation6], 0
    %s13 = scalar_lea.sflag [#allocation6], 1
    %14 = vsyncpa %s13, 0
    %15 = vsyncpa [#allocation4], 0
    %s16 = scalar_lea.sflag [#allocation4], 1
    %17 = vsyncpa %s16, 0
    loop: start=0, step=1, limit=4
    $region2: #{tpu_custom_call.1} parent=1 // loop_pre_header
      _
    $region3: #{tpu_custom_call.1} parent=1 // loop_header
      %s19 = sphi 0, %s23
      %p20 = scmp.ge.s32.totalorder %s19, 4
      %s26 = sphi 0, %s38
      %s27 = sphi 0, %s34
      %s28 = sphi 0, %s26
      %s29 = sphi 0, %s27
      %s30 = sphi 0, %s28
      %s31 = sphi 0, %s29
      %s43 = sphi 0, %s45
      %s46 = sphi 0, %s43
      %s47 = sphi 0, %s46
      %s63 = sphi 0, %s47
      %s71 = sphi 0, %s73
      %s74 = sphi 0, %s71
      %s75 = sphi 0, %s74
      %s91 = sphi 0, %s75
      %s95 = sphi 0, %s95
      %s97 = sphi 0, %s95
      %s98 = sphi 0, %s97
      %s112 = sphi 0, %s98
      %s116 = sphi 0, %s116
      %s118 = sphi 0, %s116
      %s119 = sphi 0, %s118
      %s133 = sphi 0, %s119
      %s141 = sphi 0, %s143
      %s144 = sphi 0, %s141
      %s145 = sphi 0, %s144
      %s161 = sphi 0, %s145
    $region4: #{tpu_custom_call.1} parent=1 // loop_header_branch
      %22 = sbr.rel (%p20) target = $region8
    $region5: #{tpu_custom_call.1} parent=1 // loop_body
      %s24 = ssub.s32 %s19, 1
      %s25 = ssub.s32 %s19, 2
      %s32 = sadd.s32 1, %s27
      %p33 = scmp.ge.s32.totalorder %s32, 1
      %s34 = scalar_select %p33, 0, %s32
      %s35 = sadd.s32 1, %s26
      %s36 = scalar_select %p33, %s35, %s26
      %p37 = scmp.ge.s32.totalorder %s36, 2
      %s38 = scalar_select %p37, 0, %s36
      %s39 = ssub.s32 %s26, %s38
      %s40 = ssub.s32 %s27, %s34
      %s41 = sor.u32 %s39, %s40
      %p42 = scmp.eq.s32.totalorder %s41, 0
      %s44 = sadd.s32 %s43, 1
      %s45 = scalar_select %p42, %s43, %s44
      %p48 = pneg %p42
      %p49 = scmp.eq.s32.totalorder %s19, 1
      %p50 = por %p48, %p49
      %p51 = scmp.ne.s32.totalorder %s43, %s46
      %p52 = scmp.eq.s32.totalorder %s19, 0
      %p53 = por %p51, %p52
      %p54 = scmp.ne.s32.totalorder %s43, %s46
      %p55 = scmp.eq.s32.totalorder %s24, 1
      %p56 = por %p54, %p55
      %p57 = scmp.ne.s32.totalorder %s46, %s47
      %p58 = scmp.eq.s32.totalorder %s24, 0
      %p59 = por %p57, %p58
      %p60 = scmp.ne.s32.totalorder %s46, %s47
      %p61 = scmp.eq.s32.totalorder %s25, 1
      %p62 = por %p60, %p61
      %p64 = scmp.ne.s32.totalorder %s47, %s63
      %p65 = scmp.eq.s32.totalorder %s25, 0
      %p66 = por %p64, %p65
      %s67 = ssub.s32 %s26, %s38
      %s68 = ssub.s32 %s27, %s34
      %s69 = sor.u32 %s67, %s68
      %p70 = scmp.eq.s32.totalorder %s69, 0
      %s72 = sadd.s32 %s71, 1
      %s73 = scalar_select %p70, %s71, %s72
      %p76 = pneg %p70
      %p77 = scmp.eq.s32.totalorder %s19, 1
      %p78 = por %p76, %p77
      %p79 = scmp.ne.s32.totalorder %s71, %s74
      %p80 = scmp.eq.s32.totalorder %s19, 0
      %p81 = por %p79, %p80
      %p82 = scmp.ne.s32.totalorder %s71, %s74
      %p83 = scmp.eq.s32.totalorder %s24, 1
      %p84 = por %p82, %p83
      %p85 = scmp.ne.s32.totalorder %s74, %s75
      %p86 = scmp.eq.s32.totalorder %s24, 0
      %p87 = por %p85, %p86
      %p88 = scmp.ne.s32.totalorder %s74, %s75
      %p89 = scmp.eq.s32.totalorder %s25, 1
      %p90 = por %p88, %p89
      %p92 = scmp.ne.s32.totalorder %s75, %s91
      %p93 = scmp.eq.s32.totalorder %s25, 0
      %p94 = por %p92, %p93
      %s96 = sadd.s32 %s95, 1
      %p99 = scmp.eq.s32.totalorder %s19, 1
      %p100 = scmp.ne.s32.totalorder %s95, %s97
      %p101 = scmp.eq.s32.totalorder %s19, 0
      %p102 = por %p100, %p101
      %p103 = scmp.ne.s32.totalorder %s95, %s97
      %p104 = scmp.eq.s32.totalorder %s24, 1
      %p105 = por %p103, %p104
      %p106 = scmp.ne.s32.totalorder %s97, %s98
      %p107 = scmp.eq.s32.totalorder %s24, 0
      %p108 = por %p106, %p107
      %p109 = scmp.ne.s32.totalorder %s97, %s98
      %p110 = scmp.eq.s32.totalorder %s25, 1
      %p111 = por %p109, %p110
      %p113 = scmp.ne.s32.totalorder %s98, %s112
      %p114 = scmp.eq.s32.totalorder %s25, 0
      %p115 = por %p113, %p114
      %s117 = sadd.s32 %s116, 1
      %p120 = scmp.eq.s32.totalorder %s19, 1
      %p121 = scmp.ne.s32.totalorder %s116, %s118
      %p122 = scmp.eq.s32.totalorder %s19, 0
      %p123 = por %p121, %p122
      %p124 = scmp.ne.s32.totalorder %s116, %s118
      %p125 = scmp.eq.s32.totalorder %s24, 1
      %p126 = por %p124, %p125
      %p127 = scmp.ne.s32.totalorder %s118, %s119
      %p128 = scmp.eq.s32.totalorder %s24, 0
      %p129 = por %p127, %p128
      %p130 = scmp.ne.s32.totalorder %s118, %s119
      %p131 = scmp.eq.s32.totalorder %s25, 1
      %p132 = por %p130, %p131
      %p134 = scmp.ne.s32.totalorder %s119, %s133
      %p135 = scmp.eq.s32.totalorder %s25, 0
      %p136 = por %p134, %p135
      %s137 = ssub.s32 %s26, %s38
      %s138 = ssub.s32 %s27, %s34
      %s139 = sor.u32 %s137, %s138
      %p140 = scmp.eq.s32.totalorder %s139, 0
      %s142 = sadd.s32 %s141, 1
      %s143 = scalar_select %p140, %s141, %s142
      %p146 = pneg %p140
      %p147 = scmp.eq.s32.totalorder %s19, 1
      %p148 = por %p146, %p147
      %p149 = scmp.ne.s32.totalorder %s141, %s144
      %p150 = scmp.eq.s32.totalorder %s19, 0
      %p151 = por %p149, %p150
      %p152 = scmp.ne.s32.totalorder %s141, %s144
      %p153 = scmp.eq.s32.totalorder %s24, 1
      %p154 = por %p152, %p153
      %p155 = scmp.ne.s32.totalorder %s144, %s145
      %p156 = scmp.eq.s32.totalorder %s24, 0
      %p157 = por %p155, %p156
      %p158 = scmp.ne.s32.totalorder %s144, %s145
      %p159 = scmp.eq.s32.totalorder %s25, 1
      %p160 = por %p158, %p159
      %p162 = scmp.ne.s32.totalorder %s145, %s161
      %p163 = scmp.eq.s32.totalorder %s25, 0
      %p164 = por %p162, %p163
      %p165 = scmp.le.s32.totalorder 1, %s19
      %p166 = scmp.lt.s32.totalorder %s19, 3
      %p167 = pnand %p165, %p166
      %p168 = pneg %p167
      // Predicated region
      $region9: #{tpu_custom_call.1} parent=5 // pred_check
        _
      $region10: #{tpu_custom_call.1} parent=5 // pred_check_branch
        %170 = sbr.rel (%p167) target = $region12
      $region11: #{tpu_custom_call.1} parent=5 // pred_region
        %s171 = ssub.s32 %s19, 1
        // Predicated region
        $region13: #{tpu_custom_call.1} parent=11 // pred_check
          %p172 = pneg %p108
        $region14: #{tpu_custom_call.1} parent=11 // pred_check_branch
          %174 = sbr.rel (%p172) target = $region16
        $region15: #{tpu_custom_call.1} parent=11 // pred_region
          _
        $region16: #{tpu_custom_call.1} parent=11 // pred_fallthru
          _
        // Predicated region
        $region17: #{tpu_custom_call.1} parent=11 // pred_check
          %p175 = pneg %p129
        $region18: #{tpu_custom_call.1} parent=11 // pred_check_branch
          %177 = sbr.rel (%p175) target = $region20
        $region19: #{tpu_custom_call.1} parent=11 // pred_region
          _
        $region20: #{tpu_custom_call.1} parent=11 // pred_fallthru
          _
      $region12: #{tpu_custom_call.1} parent=5 // pred_fallthru
        _
      %p178 = scmp.lt.s32.totalorder %s19, 2
      // Predicated region
      $region21: #{tpu_custom_call.1} parent=5 // pred_check
        %p179 = pneg %p178
      $region22: #{tpu_custom_call.1} parent=5 // pred_check_branch
        %181 = sbr.rel (%p179) target = $region24
      $region23: #{tpu_custom_call.1} parent=5 // pred_region
        // Predicated region
        $region25: #{tpu_custom_call.1} parent=23 // pred_check
          %p182 = pneg %p53
        $region26: #{tpu_custom_call.1} parent=23 // pred_check_branch
          %184 = sbr.rel (%p182) target = $region28
        $region27: #{tpu_custom_call.1} parent=23 // pred_region
          %s185 = sand.u32 %s43, 1
          %s186 = scalar_lea.sflag [#allocation3], %s185
          %s187 = sand.u32 %s43, 1
          %s188 = smul.addr %s187, 64
          %s189 = scalar_lea.vmem [#allocation2], %s188
          %s190 = smul.u32 2, %s27
          %s192 = ssub.s32 1024, 1024
          %193 = vsyncadd %s186, %s192
          %s194 = smul.addr %s26, 8
          %s195 = sadd.s32 %s190, %s194
          %s196 = smul.addr %s195, 128
          %s197 = scalar_lea.hbm %s0, %s196
          %s198 = sshll.u32 %s189, 4
          %s199 = int_to_ptr.vmem [resolvable:$true] %s198
          %204 = dma.hbm_to_vmem [thread:$0]  %s197, 1024, %s199, %s186, 256, 256, 16
        $region28: #{tpu_custom_call.1} parent=23 // pred_fallthru
          _
        // Predicated region
        $region29: #{tpu_custom_call.1} parent=23 // pred_check
          %p205 = pneg %p81
        $region30: #{tpu_custom_call.1} parent=23 // pred_check_branch
          %207 = sbr.rel (%p205) target = $region32
        $region31: #{tpu_custom_call.1} parent=23 // pred_region
          %s208 = sand.u32 %s71, 1
          %s209 = scalar_lea.sflag [#allocation6], %s208
          %s210 = sand.u32 %s71, 1
          %s211 = smul.addr %s210, 32
          %s212 = scalar_lea.vmem [#allocation5], %s211
          %s213 = smul.u32 2, %s27
          %s215 = ssub.s32 512, 512
          %216 = vsyncadd %s209, %s215
          %s217 = smul.addr %s26, 4
          %s218 = sadd.s32 %s213, %s217
          %s219 = smul.addr %s218, 128
          %s220 = scalar_lea.hbm %s1, %s219
          %s221 = sshll.u32 %s212, 4
          %s222 = int_to_ptr.vmem [resolvable:$true] %s221
          %227 = dma.hbm_to_vmem [thread:$0]  %s220, 512, %s222, %s209, 256, 256, 16
        $region32: #{tpu_custom_call.1} parent=23 // pred_fallthru
          _
      $region24: #{tpu_custom_call.1} parent=5 // pred_fallthru
        _
      %p228 = scmp.le.s32.totalorder 1, %s19
      %p229 = scmp.lt.s32.totalorder %s19, 3
      %p230 = pnand %p228, %p229
      %p231 = pneg %p230
      // Predicated region
      $region33: #{tpu_custom_call.1} parent=5 // pred_check
        _
      $region34: #{tpu_custom_call.1} parent=5 // pred_check_branch
        %233 = sbr.rel (%p230) target = $region36
      $region35: #{tpu_custom_call.1} parent=5 // pred_region
        %s234 = ssub.s32 %s19, 1
        %s235 = sand.u32 %s46, 1
        %s236 = scalar_lea.sflag [#allocation3], %s235
        %s237 = sand.u32 %s46, 1
        %s238 = smul.addr %s237, 64
        %s239 = scalar_lea.vmem [#allocation2], %s238
        // Predicated region
        $region37: #{tpu_custom_call.1} parent=35 // pred_check
          %p240 = pneg %p59
        $region38: #{tpu_custom_call.1} parent=35 // pred_check_branch
          %242 = sbr.rel (%p240) target = $region40
        $region39: #{tpu_custom_call.1} parent=35 // pred_region
          %243 = dma.done %s236, 1024
        $region40: #{tpu_custom_call.1} parent=35 // pred_fallthru
          _
        %s244 = sand.u32 %s74, 1
        %s245 = scalar_lea.sflag [#allocation6], %s244
        %s246 = sand.u32 %s74, 1
        %s247 = smul.addr %s246, 32
        %s248 = scalar_lea.vmem [#allocation5], %s247
        // Predicated region
        $region41: #{tpu_custom_call.1} parent=35 // pred_check
          %p249 = pneg %p87
        $region42: #{tpu_custom_call.1} parent=35 // pred_check_branch
          %251 = sbr.rel (%p249) target = $region44
        $region43: #{tpu_custom_call.1} parent=35 // pred_region
          %252 = dma.done %s245, 512
        $region44: #{tpu_custom_call.1} parent=35 // pred_fallthru
          _
        %s253 = sand.u32 %s46, 1
        %s254 = scalar_lea.sflag [#allocation3], %s253
        %s255 = sand.u32 %s46, 1
        %s256 = smul.addr %s255, 64
        %s257 = scalar_lea.vmem [#allocation2], %s256
        %p258 = pneg %p59
        %p259 = pneg %p56
        %s260 = sand.u32 %s74, 1
        %s261 = scalar_lea.sflag [#allocation6], %s260
        %s262 = sand.u32 %s74, 1
        %s263 = smul.addr %s262, 32
        %s264 = scalar_lea.vmem [#allocation5], %s263
        %p265 = pneg %p87
        %p266 = pneg %p84
        %p267 = pneg %p108
        %p268 = pneg %p105
        %p269 = pneg %p129
        %p270 = pneg %p126
        %p271 = pneg %p157
        %p272 = pneg %p154
        %s273 = sand.u32 %s144, 1
        %s274 = scalar_lea.sflag [#allocation4], %s273
        %s275 = sand.u32 %s144, 1
        %s276 = smul.addr %s275, 64
        %s277 = scalar_lea.vmem [#allocation7], %s276
        %s278 = smul.u32 2, %s29
        %s279 = smul.u32 2, %s29
        %s280 = smul.u32 2, %s29
        %v281 = vld [vmem:[%s2] sm:$0xff]
        %v282 = vld [vmem:[%s2 + $0x8] sm:$0xff]
        %v283 = vld [vmem:[%s239] sm:$0xff]
        %v284 = vld [vmem:[%s239 + $0x8] sm:$0xff]
        %v285 = vld [vmem:[%s239 + $0x10] sm:$0xff]
        %v286 = vld [vmem:[%s239 + $0x18] sm:$0xff]
        %v287 = vld [vmem:[%s239 + $0x20] sm:$0xff]
        %v288 = vld [vmem:[%s239 + $0x28] sm:$0xff]
        %v289 = vld [vmem:[%s239 + $0x30] sm:$0xff]
        %v290 = vld [vmem:[%s239 + $0x38] sm:$0xff]
        %v291 = vld [vmem:[%s3] sm:$0xff]
        %v292 = vld [vmem:[%s3 + $0x8] sm:$0xff]
        %294 = vset.pattern.permute.xlu0 0
        %295 = vperm.xlu0 %294, %v291
        %v296 = vpop.permute.xlu0 %295
        %299 = vset.pattern.permute.xlu0 0
        %300 = vperm.xlu0 %299, %v292
        %v301 = vpop.permute.xlu0 %300
        %vm303 = vcmask 261120
        %v305 = vsel %vm303, %v281, 0
        %v308 = vsel %vm303, %v282, 0
        %310 = vmatprep.subr.mxu0 %v284
        %311 = vmatpush1.msra.mxu0 %v283
        %312 = vmatprep.subr.mxu0 %v286
        %313 = vmatpush1.msra.mxu0 %v285
        %314 = vmatprep.subr.mxu0 %v288
        %315 = vmatpush1.msra.mxu0 %v287
        %316 = vmatprep.subr.mxu0 %v290
        %317 = vmatpush1.msra.mxu0 %v289
        %318 = vmatprep.subr.mxu0 0.0
        %319 = vmatpush1.msra.mxu0 0.0
        %320 = vmatprep.subr.mxu0 0.0
        %321 = vmatpush1.msra.mxu0 0.0
        %322 = vmatprep.subr.mxu0 0.0
        %323 = vmatpush1.msra.mxu0 0.0
        %324 = vmatprep.subr.mxu0 0.0
        %325 = vmatpush1.msra.mxu0 0.0
        %326 = vmatprep.subr.mxu0 0.0
        %327 = vmatpush1.msra.mxu0 0.0
        %328 = vmatprep.subr.mxu0 0.0
        %329 = vmatpush1.msra.mxu0 0.0
        %330 = vmatprep.subr.mxu0 0.0
        %331 = vmatpush1.msra.mxu0 0.0
        %332 = vmatprep.subr.mxu0 0.0
        %333 = vmatpush1.msra.mxu0 0.0
        %334 = vmatprep.subr.mxu0 0.0
        %335 = vmatpush1.msra.mxu0 0.0
        %336 = vmatprep.subr.mxu0 0.0
        %337 = vmatpush1.msra.mxu0 0.0
        %338 = vmatprep.subr.mxu0 0.0
        %339 = vmatpush1.msra.mxu0 0.0
        %340 = vmatprep.subr.mxu0 0.0
        %341 = vmatpush1.msra.mxu0 0.0
        %342 = vmatprep.subr.mxu0 0.0
        %343 = vmatpush1.msra.mxu0 0.0
        %344 = vmatprep.subr.mxu0 0.0
        %345 = vmatpush1.msra.mxu0 0.0
        %346 = vmatprep.subr.mxu0 0.0
        %347 = vmatpush1.msra.mxu0 0.0
        %348 = vmatprep.subr.mxu0 0.0
        %349 = vmatpush1.msra.mxu0 0.0
        %350 = vmatprep.subr.mxu0 0.0
        %351 = vmatpush1.msra.mxu0 0.0
        %352 = vmatprep.subr.mxu0 0.0
        %353 = vmatpush1.msra.mxu0 0.0
        %354 = vmatprep.subr.mxu0 0.0
        %355 = vmatpush1.msra.mxu0 0.0
        %356 = vmatprep.subr.mxu0 0.0
        %357 = vmatpush1.msra.mxu0 0.0
        %358 = vmatprep.subr.mxu0 0.0
        %359 = vmatpush1.msra.mxu0 0.0
        %360 = vmatprep.subr.mxu0 0.0
        %361 = vmatpush1.msra.mxu0 0.0
        %362 = vmatprep.subr.mxu0 0.0
        %363 = vmatpush1.msra.mxu0 0.0
        %364 = vmatprep.subr.mxu0 0.0
        %365 = vmatpush1.msra.mxu0 0.0
        %366 = vmatprep.subr.mxu0 0.0
        %367 = vmatpush1.msra.mxu0 0.0
        %368 = vmatprep.subr.mxu0 0.0
        %369 = vmatpush1.msra.mxu0 0.0
        %370 = vmatprep.subr.mxu0 0.0
        %371 = vmatpush1.msra.mxu0 0.0
        %372 = vmatprep.subr.mxu0 0.0
        %373 = vmatpush1.msra.mxu0 0.0
        %374 = vmatprep.mubr.f32.mxu0 0.0
        %375 = vmatmul.mubr.f32.gmra.mrb[0].mxu0 %v305
        %v376 = vpop.f32.mrb[0].mxu0
        %v377 = vadd.f32 %v296, %v376
        %v378 = vpop.f32.mrb[0].mxu0
        %v379 = vadd.f32 %v296, %v378
        %380 = vmatprep.mubr.f32.mxu0 0.0
        %381 = vmatmul.mubr.f32.gmra.mrb[0].mxu0 %v308
        %v382 = vpop.f32.mrb[0].mxu0
        %v383 = vadd.f32 %v301, %v382
        %v384 = vpop.f32.mrb[0].mxu0
        %v385 = vadd.f32 %v301, %v384
        %386 = vdwg.mxu0
        %v387 = vmax.f32 %v377, 0.0
        %v388 = vmax.f32 %v379, 0.0
        %v389 = vmax.f32 %v383, 0.0
        %v390 = vmax.f32 %v385, 0.0
        %391 = vst [vmem:[%s277] sm:$0xff] %v387
        %392 = vst [vmem:[%s277 + $0x8] sm:$0xff] %v388
        %393 = vst [vmem:[%s277 + $0x10] sm:$0xff] %v389
        %394 = vst [vmem:[%s277 + $0x18] sm:$0xff] %v390
        %v395 = vld [vmem:[%s248] sm:$0xff]
        %v396 = vld [vmem:[%s248 + $0x8] sm:$0xff]
        %v397 = vld [vmem:[%s248 + $0x10] sm:$0xff]
        %v398 = vld [vmem:[%s248 + $0x18] sm:$0xff]
        %399 = vst [vmem:[%s277 + $0x20] sm:$0xff] %v395
        %400 = vst [vmem:[%s277 + $0x28] sm:$0xff] %v396
        %401 = vst [vmem:[%s277 + $0x30] sm:$0xff] %v397
        %402 = vst [vmem:[%s277 + $0x38] sm:$0xff] %v398
        %s403 = sand.u32 %s144, 1
        %s404 = scalar_lea.sflag [#allocation4], %s403
        %s405 = sand.u32 %s144, 1
        %s406 = smul.addr %s405, 64
        %s407 = scalar_lea.vmem [#allocation7], %s406
        // Predicated region
        $region45: #{tpu_custom_call.1} parent=35 // pred_check
          %p408 = pneg %p154
        $region46: #{tpu_custom_call.1} parent=35 // pred_check_branch
          %410 = sbr.rel (%p408) target = $region48
        $region47: #{tpu_custom_call.1} parent=35 // pred_region
          %s411 = smul.u32 2, %s29
          %s413 = ssub.s32 1024, 1024
          %414 = vsyncadd %s404, %s413
          %s415 = smul.addr %s28, 8
          %s416 = sadd.s32 %s411, %s415
          %s417 = smul.addr %s416, 128
          %s418 = scalar_lea.hbm %s4, %s417
          %s419 = sshll.u32 %s407, 4
          %s420 = int_to_ptr.vmem [resolvable:$true] %s419
          %425 = dma.vmem_to_hbm [thread:$0]  %s420, 1024, %s418, %s404, 256, 256, 16
        $region48: #{tpu_custom_call.1} parent=35 // pred_fallthru
          _
      $region36: #{tpu_custom_call.1} parent=5 // pred_fallthru
        _
      %p426 = scmp.le.s32.totalorder 2, %s19
      // Predicated region
      $region49: #{tpu_custom_call.1} parent=5 // pred_check
        %p427 = pneg %p426
      $region50: #{tpu_custom_call.1} parent=5 // pred_check_branch
        %429 = sbr.rel (%p427) target = $region52
      $region51: #{tpu_custom_call.1} parent=5 // pred_region
        %s430 = ssub.s32 %s19, 2
        // Predicated region
        $region53: #{tpu_custom_call.1} parent=51 // pred_check
          %p431 = pneg %p160
        $region54: #{tpu_custom_call.1} parent=51 // pred_check_branch
          %433 = sbr.rel (%p431) target = $region56
        $region55: #{tpu_custom_call.1} parent=51 // pred_region
          %s434 = sand.u32 %s145, 1
          %s435 = scalar_lea.sflag [#allocation4], %s434
          %s436 = sand.u32 %s145, 1
          %s437 = smul.addr %s436, 64
          %s438 = scalar_lea.vmem [#allocation7], %s437
          %439 = dma.done %s435, 1024
        $region56: #{tpu_custom_call.1} parent=51 // pred_fallthru
          _
      $region52: #{tpu_custom_call.1} parent=5 // pred_fallthru
        _
    $region6: #{tpu_custom_call.1} parent=1 // loop_footer
      %s23 = sadd.s32 1, %s19
    $region7: #{tpu_custom_call.1} parent=1 // loop_footer_branch
      %18 = sbr.rel target = $region3
    $region8: #{tpu_custom_call.1} parent=1 // loop_exit
      _
    %440 = vsyncpa [#allocation3], 1
    %s441 = scalar_lea.sflag [#allocation3], 1
    %442 = vsyncpa %s441, 1
    %443 = vsyncpa [#allocation6], 1
    %s444 = scalar_lea.sflag [#allocation6], 1
    %445 = vsyncpa %s444, 1
    %446 = vsyncpa [#allocation4], 1
    %s447 = scalar_lea.sflag [#allocation4], 1
    %448 = vsyncpa %s447, 1

</llo_original>
